<compile_context>
chip_gen: v5e
topology: v5e:2x2
jax: 0.10.0
libtpu: 0.0.40
codegen_flags: <defaults>
</compile_context>

<pallas_src>
import functools

import jax
import jax.numpy as jnp
import numpy as np
from jax.experimental import pallas as pl
from jax.experimental.pallas import tpu as pltpu


# ----------------------------- fused Pallas kernel ---------------------------

def _upblock_kernel(x_ref, su_ref, sd_ref, sm_ref, wt_ref, wu_ref,
                    g1_ref, b1_ref, a1_ref, g2_ref, b2_ref, a2_ref,
                    o_ref, *, n, h, w):
    """Conv3x3 -> BN -> ReLU -> ConvT2x2(s=2) -> BN -> ReLU, all in VMEM.

    Packed layouts (last dim lane-dense; all blocks are full arrays, grid=(1,)):
      x_ref : (R, W*Cin)         R = N*H input rows, NHWC packed along lanes
      su/sd : (R, R)             row-shift (+/-1 in H) matrices with the
                                 batch-boundary SAME-padding zeros folded in
      sm_ref: (2, 2R)            row-sum selector for one-pass BN statistics
      wt_ref: (3*W*Cin, W*Cmid)  Toeplitz 3x3 conv weight, 3 H-taps stacked on K
      wu_ref: (W*Cmid, 4W*Cout)  block-diag ConvT2x2 weight, both H-taps on N
      g*/b* : (1, L)             BN affine params tiled onto the packed lanes
      a*    : (L, L)             1.0 where lane_i % C == lane_j % C
      o_ref : (R, 4W*Cout)       packed output, lane = (a, wo, b, co)
    """
    x = x_ref[...]
    sm = sm_ref[...]

    def bn_relu(t, same, gamma, beta, count):
        # Training-mode BatchNorm (+ ReLU) on a packed (rows, lanes) tensor.
        # One-pass stats, everything in f32, reductions on the MXU:
        #   raw   = sm @ [t ; t*t]       -> (2, L)  row sums of x and x^2
        #   stats = raw @ same / count   -> (2, L)  per-channel E[x], E[x^2]
        tt = jnp.concatenate([t, t * t], axis=0)           # (2R, L), R % 8 == 0
        raw = jnp.dot(sm, tt, preferred_element_type=jnp.float32)
        stats = jnp.dot(raw, same,
                        preferred_element_type=jnp.float32) * (1.0 / count)
        mean = stats[0:1, :]
        var = stats[1:2, :] - mean * mean
        inv = jax.lax.rsqrt(var + 1e-5)
        return jnp.maximum((t - mean) * (inv * gamma) + beta, 0.0)

    # --- Block.conv : 3x3 SAME conv as ONE Toeplitz matmul (K = 3*W*Cin).
    #     H-direction padding = the two row-shift matmuls; W-direction padding
    #     is already folded into the Toeplitz weight's structural zeros.
    x_up = jnp.dot(su_ref[...], x, preferred_element_type=jnp.float32)  # row r -> x[r-1]
    x_dn = jnp.dot(sd_ref[...], x, preferred_element_type=jnp.float32)  # row r -> x[r+1]
    lhs = jnp.concatenate([x_up, x, x_dn], axis=1)          # (R, 3*W*Cin), lane-aligned
    acc = jnp.dot(lhs, wt_ref[...], preferred_element_type=jnp.float32)
    # (conv bias omitted: exactly cancelled by the BN mean subtraction below)

    # --- Block.bn2 + ReLU (stats over N,H,W; channel of lane j is j % Cmid).
    y1 = bn_relu(acc, a1_ref[...], g1_ref[...], b1_ref[...], float(n * h * w))

    # --- up_conv : ConvTranspose2d(k=2, s=2) as ONE block-diagonal matmul;
    #     output lanes carry both H sub-rows: lane = (a, wo, b, co).
    #     (bias omitted: cancelled by the BN below)
    z = jnp.dot(y1, wu_ref[...], preferred_element_type=jnp.float32)

    # --- batch_norm + ReLU over the full upsampled tensor.
    o_ref[...] = bn_relu(z, a2_ref[...], g2_ref[...], b2_ref[...],
                         float(n * (2 * h) * (2 * w)))


# ----------------- one-time structured-operand preparation -------------------

def _conv3x3_toeplitz(w_hwio, w):
    # (3, 3, Cin, Cmid) -> (3*W*Cin, W*Cmid); W-direction SAME zero padding is
    # folded into the matrix structure, and the 3 H-taps are stacked along K so
    # the kernel performs a single conv matmul.
    kh_, kw_, cin, cmid = w_hwio.shape
    shift = np.zeros((kw_, w, w), np.float32)       # shift[kw, src_col, dst_col]
    for kw in range(kw_):
        for dst in range(w):
            src = dst + kw - 1
            if 0 <= src < w:
                shift[kw, src, dst] = 1.0
    wt = jnp.einsum("ksd,hkio->hsido", jnp.asarray(shift), w_hwio)
    return wt.reshape(kh_ * w * cin, w * cmid)


def _convT2x2_blockdiag(w_pt, w):
    # PyTorch ConvTranspose2d weight (Cmid, Cout, 2, 2) -> one block-diagonal
    # map (W*Cmid) -> (2*2W*Cout); output lane = (a, wo, b, co) where a/b are
    # the H/W sub-pixel taps (output pixel = (2*hi+a, 2*wo+b)).
    cmid, cout, kh_, kw_ = w_pt.shape
    eye = jnp.eye(w, dtype=w_pt.dtype)
    wu = jnp.einsum("wv,ioab->awivbo", eye, w_pt)
    wu = wu.reshape(kh_, w * cmid, w * kw_ * cout)
    return jnp.concatenate([wu[0], wu[1]], axis=1)


def _same_channel_matrix(lanes, c):
    idx = np.arange(lanes)
    return jnp.asarray((idx[:, None] % c == idx[None, :] % c).astype(np.float32))


def _hshift_matrices(n, h):
    # x_up = su @ x : row r -> x[r-1]  (0 at the first row of each image)
    # x_dn = sd @ x : row r -> x[r+1]  (0 at the last  row of each image)
    rows = n * h
    su = np.zeros((rows, rows), np.float32)
    sd = np.zeros((rows, rows), np.float32)
    for r in range(rows):
        if r % h != 0:
            su[r, r - 1] = 1.0
        if r % h != h - 1:
            sd[r, r + 1] = 1.0
    return jnp.asarray(su), jnp.asarray(sd)


def _rowsum_selector(rows):
    m = np.zeros((2, 2 * rows), np.float32)
    m[0, :rows] = 1.0
    m[1, rows:] = 1.0
    return jnp.asarray(m)


def prepare_upblock_operands(p, *, n, h, w):
    """Build all structured kernel operands ONCE (per weight update / shape)."""
    cin, cmid = p["conv_w"].shape[2], p["conv_w"].shape[3]
    cout = p["up_w"].shape[1]
    # Lane-dense layout check: full-lane (unmasked) vector stores require the
    # packed lane counts to be multiples of 128.
    for name, lanes in (("W*Cin", w * cin), ("W*Cmid", w * cmid),
                        ("4*W*Cout", 4 * w * cout)):
        assert lanes % 128 == 0, f"{name}={lanes} is not a multiple of 128"
    su, sd = _hshift_matrices(n, h)
    # p["conv_b"] / p["up_b"] intentionally unused: per-channel biases are
    # exactly cancelled by the training-mode BatchNorm that follows each conv.
    return {
        "su": su, "sd": sd, "sm": _rowsum_selector(n * h),
        "wt": _conv3x3_toeplitz(p["conv_w"], w),
        "wu": _convT2x2_blockdiag(p["up_w"], w),
        "g1": jnp.tile(p["bn1_g"], w).reshape(1, w * cmid),
        "b1": jnp.tile(p["bn1_b"], w).reshape(1, w * cmid),
        "a1": _same_channel_matrix(w * cmid, cmid),
        "g2": jnp.tile(p["bn2_g"], 4 * w).reshape(1, 4 * w * cout),
        "b2": jnp.tile(p["bn2_b"], 4 * w).reshape(1, 4 * w * cout),
        "a2": _same_channel_matrix(4 * w * cout, cout),
    }


# --------------------------------- forward -----------------------------------

@jax.jit
def upblock_forward(x_nchw, ops):
    n, cin, h, w = x_nchw.shape
    rows = n * h
    l_in = ops["wt"].shape[0] // 3        # W*Cin
    l_mid = ops["wt"].shape[1]            # W*Cmid
    l_out = ops["wu"].shape[1]            # 4*W*Cout
    cout = l_out // (4 * w)

    # Pack NCHW -> (N*H, W*Cin) lane-dense rows (layout plumbing only).
    x_packed = jnp.transpose(x_nchw, (0, 2, 3, 1)).reshape(rows, w * cin)

    flops = (2 * 2 * rows * rows * l_in               # row-shift matmuls
             + 2 * rows * (3 * l_in) * l_mid          # Toeplitz conv
             + 2 * rows * l_mid * l_out               # block-diag ConvT
             + 2 * 2 * (2 * rows) * l_mid + 2 * 2 * l_mid * l_mid   # BN1 dots
             + 2 * 2 * (2 * rows) * l_out + 2 * 2 * l_out * l_out)  # BN2 dots
    bytes_accessed = 4 * (x_packed.size + ops["su"].size + ops["sd"].size
                          + ops["sm"].size + ops["wt"].size + ops["wu"].size
                          + ops["g1"].size + ops["b1"].size + ops["a1"].size
                          + ops["g2"].size + ops["b2"].size + ops["a2"].size
                          + rows * l_out)

    def full(shape):
        return pl.BlockSpec(shape, lambda i: (0,) * len(shape))

    kernel = functools.partial(_upblock_kernel, n=n, h=h, w=w)
    # TODO(synk): at larger shapes, tile over rows/W with a "parallel" grid axis
    # (two-pass partial-stats BN) so v7x's two TensorCores share work, cast the
    # matmul operands to bf16 once MXU-bound, and set vmem_limit_bytes since the
    # Toeplitz / block-diag weights grow as W^2 (v7x has only 64 MiB VMEM).
    out = pl.pallas_call(
        kernel,
        out_shape=jax.ShapeDtypeStruct((rows, l_out), jnp.float32),
        grid=(1,),
        in_specs=[
            full((rows, l_in)),                                   # x
            full((rows, rows)), full((rows, rows)),               # su, sd
            full((2, 2 * rows)),                                  # sm
            full((3 * l_in, l_mid)),                              # wt
            full((l_mid, l_out)),                                 # wu
            full((1, l_mid)), full((1, l_mid)), full((l_mid, l_mid)),   # g1,b1,a1
            full((1, l_out)), full((1, l_out)), full((l_out, l_out)),   # g2,b2,a2
        ],
        out_specs=full((rows, l_out)),
        compiler_params=pltpu.CompilerParams(
            dimension_semantics=("arbitrary",)),
        cost_estimate=pl.CostEstimate(flops=int(flops),
                                      transcendentals=int(l_mid + l_out),
                                      bytes_accessed=int(bytes_accessed)),
    )(x_packed, ops["su"], ops["sd"], ops["sm"], ops["wt"], ops["wu"],
      ops["g1"], ops["b1"], ops["a1"], ops["g2"], ops["b2"], ops["a2"])

    # Un-pack: out[bi*H+hi, ((a*W+wo)*2+b)*Cout+co] -> NCHW (N, Cout, 2H, 2W).
    out = out.reshape(n, h, 2, w, 2, cout)                 # (bi, hi, a, wo, b, co)
    out = jnp.transpose(out, (0, 5, 1, 2, 3, 4)).reshape(n, cout, 2 * h, 2 * w)
    return out


# ----------------------------- pure-JAX reference ----------------------------

def _ref_bn_relu(x, g, b):
    mean = jnp.mean(x, axis=(0, 1, 2), keepdims=True)
    var = jnp.mean(jnp.square(x - mean), axis=(0, 1, 2), keepdims=True)
    return jnp.maximum((x - mean) * jax.lax.rsqrt(var + 1e-5) * g + b, 0.0)


def ref_forward(x_nchw, p):
    x = jnp.transpose(x_nchw, (0, 2, 3, 1))
    y = jax.lax.conv_general_dilated(
        x, p["conv_w"], window_strides=(1, 1), padding="SAME",
        dimension_numbers=("NHWC", "HWIO", "NHWC")) + p["conv_b"]
    y = _ref_bn_relu(y, p["bn1_g"], p["bn1_b"])
    z = jnp.einsum("nijc,coab->niajbo", y, p["up_w"])
    n_, h_, _, w_, _, cout = z.shape
    z = z.reshape(n_, 2 * h_, 2 * w_, cout) + p["up_b"]
    z = _ref_bn_relu(z, p["bn2_g"], p["bn2_b"])
    return jnp.transpose(z, (0, 3, 1, 2))


# ------------------------------------ main -----------------------------------

if __name__ == "__main__":
    N, Cin, Cout, H, W = 2, 8, 4, 16, 16
    ks = jax.random.split(jax.random.PRNGKey(0), 9)
    params = {
        "conv_w": jax.random.normal(ks[0], (3, 3, Cin, Cin), jnp.float32)
                  / jnp.sqrt(9.0 * Cin),
        "conv_b": 0.1 * jax.random.normal(ks[1], (Cin,), jnp.float32),
        "bn1_g": 1.0 + 0.1 * jax.random.normal(ks[2], (Cin,), jnp.float32),
        "bn1_b": 0.1 * jax.random.normal(ks[3], (Cin,), jnp.float32),
        "up_w": jax.random.normal(ks[4], (Cin, Cout, 2, 2), jnp.float32)
                / jnp.sqrt(4.0 * Cin),
        "up_b": 0.1 * jax.random.normal(ks[5], (Cout,), jnp.float32),
        "bn2_g": 1.0 + 0.1 * jax.random.normal(ks[6], (Cout,), jnp.float32),
        "bn2_b": 0.1 * jax.random.normal(ks[7], (Cout,), jnp.float32),
    }
    x = jax.random.normal(ks[8], (N, Cin, H, W), jnp.float32)

    ops = prepare_upblock_operands(params, n=N, h=H, w=W)   # once per weights/shape
    out = jax.block_until_ready(upblock_forward(x, ops))
    ref = jax.block_until_ready(ref_forward(x, params))

    assert out.shape == (N, Cout, 2 * H, 2 * W), out.shape
    np.testing.assert_allclose(np.asarray(out), np.asarray(ref),
                               rtol=2e-3, atol=2e-3)
    print("KERNEL_OK")
</pallas_src>

<mosaic_0001>
module attributes {stable_mosaic.version = 11 : i64} {
  func.func @_upblock_kernel(%arg0: i32, %arg1: memref<32x128xf32, #tpu.memory_space<vmem>>, %arg2: memref<32x32xf32, #tpu.memory_space<vmem>>, %arg3: memref<32x32xf32, #tpu.memory_space<vmem>>, %arg4: memref<2x64xf32, #tpu.memory_space<vmem>>, %arg5: memref<384x128xf32, #tpu.memory_space<vmem>>, %arg6: memref<128x256xf32, #tpu.memory_space<vmem>>, %arg7: memref<1x128xf32, #tpu.memory_space<vmem>>, %arg8: memref<1x128xf32, #tpu.memory_space<vmem>>, %arg9: memref<128x128xf32, #tpu.memory_space<vmem>>, %arg10: memref<1x256xf32, #tpu.memory_space<vmem>>, %arg11: memref<1x256xf32, #tpu.memory_space<vmem>>, %arg12: memref<256x256xf32, #tpu.memory_space<vmem>>, %arg13: memref<32x256xf32, #tpu.memory_space<vmem>>) attributes {dimension_semantics = [#tpu.dimension_semantics<arbitrary>], iteration_bounds = array<i64: 1>, scalar_prefetch = 0 : i64, scratch_operands = 0 : i64, tpu.core_type = #tpu.core_type<tc>, window_params = [{pipeline_mode = #tpu.pipeline_mode<synchronous>, transform_indices = @transform_0, window_bounds = array<i64: 32, 128>}, {pipeline_mode = #tpu.pipeline_mode<synchronous>, transform_indices = @transform_1, window_bounds = array<i64: 32, 32>}, {pipeline_mode = #tpu.pipeline_mode<synchronous>, transform_indices = @transform_2, window_bounds = array<i64: 32, 32>}, {pipeline_mode = #tpu.pipeline_mode<synchronous>, transform_indices = @transform_3, window_bounds = array<i64: 2, 64>}, {pipeline_mode = #tpu.pipeline_mode<synchronous>, transform_indices = @transform_4, window_bounds = array<i64: 384, 128>}, {pipeline_mode = #tpu.pipeline_mode<synchronous>, transform_indices = @transform_5, window_bounds = array<i64: 128, 256>}, {pipeline_mode = #tpu.pipeline_mode<synchronous>, transform_indices = @transform_6, window_bounds = array<i64: 1, 128>}, {pipeline_mode = #tpu.pipeline_mode<synchronous>, transform_indices = @transform_7, window_bounds = array<i64: 1, 128>}, {pipeline_mode = #tpu.pipeline_mode<synchronous>, transform_indices = @transform_8, window_bounds = array<i64: 128, 128>}, {pipeline_mode = #tpu.pipeline_mode<synchronous>, transform_indices = @transform_9, window_bounds = array<i64: 1, 256>}, {pipeline_mode = #tpu.pipeline_mode<synchronous>, transform_indices = @transform_10, window_bounds = array<i64: 1, 256>}, {pipeline_mode = #tpu.pipeline_mode<synchronous>, transform_indices = @transform_11, window_bounds = array<i64: 256, 256>}, {pipeline_mode = #tpu.pipeline_mode<synchronous>, transform_indices = @transform_12, window_bounds = array<i64: 32, 256>}]} {
    %c0 = arith.constant 0 : index
    %c0_0 = arith.constant 0 : index
    %0 = vector.load %arg1[%c0, %c0_0] : memref<32x128xf32, #tpu.memory_space<vmem>>, vector<32x128xf32>
    %c0_1 = arith.constant 0 : index
    %c0_2 = arith.constant 0 : index
    %1 = vector.load %arg4[%c0_1, %c0_2] : memref<2x64xf32, #tpu.memory_space<vmem>>, vector<2x64xf32>
    %c0_3 = arith.constant 0 : index
    %c0_4 = arith.constant 0 : index
    %2 = vector.load %arg2[%c0_3, %c0_4] : memref<32x32xf32, #tpu.memory_space<vmem>>, vector<32x32xf32>
    %cst = arith.constant dense<0.000000e+00> : vector<32x128xf32>
    %3 = tpu.matmul %2, %0, %cst {dimension_numbers = #tpu.dot_dimension_numbers<[1], [0], [0], [1], [0, 0, 1, 1], [], []>} : vector<32x32xf32>, vector<32x128xf32>, vector<32x128xf32> -> vector<32x128xf32>
    %c0_5 = arith.constant 0 : index
    %c0_6 = arith.constant 0 : index
    %4 = vector.load %arg3[%c0_5, %c0_6] : memref<32x32xf32, #tpu.memory_space<vmem>>, vector<32x32xf32>
    %cst_7 = arith.constant dense<0.000000e+00> : vector<32x128xf32>
    %5 = tpu.matmul %4, %0, %cst_7 {dimension_numbers = #tpu.dot_dimension_numbers<[1], [0], [0], [1], [0, 0, 1, 1], [], []>} : vector<32x32xf32>, vector<32x128xf32>, vector<32x128xf32> -> vector<32x128xf32>
    %6 = tpu.concatenate %3, %0, %5 in 1 : vector<32x128xf32>, vector<32x128xf32>, vector<32x128xf32> -> vector<32x384xf32>
    %c0_8 = arith.constant 0 : index
    %c0_9 = arith.constant 0 : index
    %7 = vector.load %arg5[%c0_8, %c0_9] : memref<384x128xf32, #tpu.memory_space<vmem>>, vector<384x128xf32>
    %cst_10 = arith.constant dense<0.000000e+00> : vector<32x128xf32>
    %8 = tpu.matmul %6, %7, %cst_10 {dimension_numbers = #tpu.dot_dimension_numbers<[1], [0], [0], [1], [0, 0, 1, 1], [], []>} : vector<32x384xf32>, vector<384x128xf32>, vector<32x128xf32> -> vector<32x128xf32>
    %c0_11 = arith.constant 0 : index
    %c0_12 = arith.constant 0 : index
    %9 = vector.load %arg9[%c0_11, %c0_12] : memref<128x128xf32, #tpu.memory_space<vmem>>, vector<128x128xf32>
    %c0_13 = arith.constant 0 : index
    %c0_14 = arith.constant 0 : index
    %10 = vector.load %arg7[%c0_13, %c0_14] : memref<1x128xf32, #tpu.memory_space<vmem>>, vector<1x128xf32>
    %c0_15 = arith.constant 0 : index
    %c0_16 = arith.constant 0 : index
    %11 = vector.load %arg8[%c0_15, %c0_16] : memref<1x128xf32, #tpu.memory_space<vmem>>, vector<1x128xf32>
    %12 = arith.mulf %8, %8 : vector<32x128xf32>
    %13 = tpu.concatenate %8, %12 in 0 : vector<32x128xf32>, vector<32x128xf32> -> vector<64x128xf32>
    %cst_17 = arith.constant dense<0.000000e+00> : vector<2x128xf32>
    %14 = tpu.matmul %1, %13, %cst_17 {dimension_numbers = #tpu.dot_dimension_numbers<[1], [0], [0], [1], [0, 0, 1, 1], [], []>} : vector<2x64xf32>, vector<64x128xf32>, vector<2x128xf32> -> vector<2x128xf32>
    %cst_18 = arith.constant dense<0.000000e+00> : vector<2x128xf32>
    %15 = tpu.matmul %14, %9, %cst_18 {dimension_numbers = #tpu.dot_dimension_numbers<[1], [0], [0], [1], [0, 0, 1, 1], [], []>} : vector<2x128xf32>, vector<128x128xf32>, vector<2x128xf32> -> vector<2x128xf32>
    %cst_19 = arith.constant 0.001953125 : f32
    %16 = vector.broadcast %cst_19 : f32 to vector<2x128xf32>
    %17 = arith.mulf %15, %16 : vector<2x128xf32>
    %18 = vector.extract_strided_slice %17 {offsets = [0, 0], sizes = [1, 128], strides = [1, 1]} : vector<2x128xf32> to vector<1x128xf32>
    %19 = vector.extract_strided_slice %17 {offsets = [1, 0], sizes = [1, 128], strides = [1, 1]} : vector<2x128xf32> to vector<1x128xf32>
    %20 = arith.mulf %18, %18 : vector<1x128xf32>
    %21 = arith.subf %19, %20 : vector<1x128xf32>
    %cst_20 = arith.constant 9.99999974E-6 : f32
    %22 = vector.broadcast %cst_20 : f32 to vector<1x128xf32>
    %23 = arith.addf %21, %22 : vector<1x128xf32>
    %24 = math.rsqrt %23 : vector<1x128xf32>
    %25 = vector.broadcast %18 : vector<1x128xf32> to vector<32x128xf32>
    %26 = arith.subf %8, %25 : vector<32x128xf32>
    %27 = arith.mulf %24, %10 : vector<1x128xf32>
    %28 = vector.broadcast %27 : vector<1x128xf32> to vector<32x128xf32>
    %29 = arith.mulf %26, %28 : vector<32x128xf32>
    %30 = vector.broadcast %11 : vector<1x128xf32> to vector<32x128xf32>
    %31 = arith.addf %29, %30 : vector<32x128xf32>
    %cst_21 = arith.constant 0.000000e+00 : f32
    %32 = vector.broadcast %cst_21 : f32 to vector<32x128xf32>
    %33 = arith.maximumf %31, %32 : vector<32x128xf32>
    %c0_22 = arith.constant 0 : index
    %c0_23 = arith.constant 0 : index
    %34 = vector.load %arg6[%c0_22, %c0_23] : memref<128x256xf32, #tpu.memory_space<vmem>>, vector<128x256xf32>
    %cst_24 = arith.constant dense<0.000000e+00> : vector<32x256xf32>
    %35 = tpu.matmul %33, %34, %cst_24 {dimension_numbers = #tpu.dot_dimension_numbers<[1], [0], [0], [1], [0, 0, 1, 1], [], []>} : vector<32x128xf32>, vector<128x256xf32>, vector<32x256xf32> -> vector<32x256xf32>
    %c0_25 = arith.constant 0 : index
    %c0_26 = arith.constant 0 : index
    %36 = vector.load %arg12[%c0_25, %c0_26] : memref<256x256xf32, #tpu.memory_space<vmem>>, vector<256x256xf32>
    %c0_27 = arith.constant 0 : index
    %c0_28 = arith.constant 0 : index
    %37 = vector.load %arg10[%c0_27, %c0_28] : memref<1x256xf32, #tpu.memory_space<vmem>>, vector<1x256xf32>
    %c0_29 = arith.constant 0 : index
    %c0_30 = arith.constant 0 : index
    %38 = vector.load %arg11[%c0_29, %c0_30] : memref<1x256xf32, #tpu.memory_space<vmem>>, vector<1x256xf32>
    %39 = arith.mulf %35, %35 : vector<32x256xf32>
    %40 = tpu.concatenate %35, %39 in 0 : vector<32x256xf32>, vector<32x256xf32> -> vector<64x256xf32>
    %cst_31 = arith.constant dense<0.000000e+00> : vector<2x256xf32>
    %41 = tpu.matmul %1, %40, %cst_31 {dimension_numbers = #tpu.dot_dimension_numbers<[1], [0], [0], [1], [0, 0, 1, 1], [], []>} : vector<2x64xf32>, vector<64x256xf32>, vector<2x256xf32> -> vector<2x256xf32>
    %cst_32 = arith.constant dense<0.000000e+00> : vector<2x256xf32>
    %42 = tpu.matmul %41, %36, %cst_32 {dimension_numbers = #tpu.dot_dimension_numbers<[1], [0], [0], [1], [0, 0, 1, 1], [], []>} : vector<2x256xf32>, vector<256x256xf32>, vector<2x256xf32> -> vector<2x256xf32>
    %cst_33 = arith.constant 4.8828125E-4 : f32
    %43 = vector.broadcast %cst_33 : f32 to vector<2x256xf32>
    %44 = arith.mulf %42, %43 : vector<2x256xf32>
    %45 = vector.extract_strided_slice %44 {offsets = [0, 0], sizes = [1, 256], strides = [1, 1]} : vector<2x256xf32> to vector<1x256xf32>
    %46 = vector.extract_strided_slice %44 {offsets = [1, 0], sizes = [1, 256], strides = [1, 1]} : vector<2x256xf32> to vector<1x256xf32>
    %47 = arith.mulf %45, %45 : vector<1x256xf32>
    %48 = arith.subf %46, %47 : vector<1x256xf32>
    %cst_34 = arith.constant 9.99999974E-6 : f32
    %49 = vector.broadcast %cst_34 : f32 to vector<1x256xf32>
    %50 = arith.addf %48, %49 : vector<1x256xf32>
    %51 = math.rsqrt %50 : vector<1x256xf32>
    %52 = vector.broadcast %45 : vector<1x256xf32> to vector<32x256xf32>
    %53 = arith.subf %35, %52 : vector<32x256xf32>
    %54 = arith.mulf %51, %37 : vector<1x256xf32>
    %55 = vector.broadcast %54 : vector<1x256xf32> to vector<32x256xf32>
    %56 = arith.mulf %53, %55 : vector<32x256xf32>
    %57 = vector.broadcast %38 : vector<1x256xf32> to vector<32x256xf32>
    %58 = arith.addf %56, %57 : vector<32x256xf32>
    %cst_35 = arith.constant 0.000000e+00 : f32
    %59 = vector.broadcast %cst_35 : f32 to vector<32x256xf32>
    %60 = arith.maximumf %58, %59 : vector<32x256xf32>
    %c0_36 = arith.constant 0 : index
    %c0_37 = arith.constant 0 : index
    %61 = vector.load %arg13[%c0_36, %c0_37] : memref<32x256xf32, #tpu.memory_space<vmem>>, vector<32x256xf32>
    tpu.vector_store %arg13[%c0_36, %c0_37], %60 {strides = array<i32>} : memref<32x256xf32, #tpu.memory_space<vmem>>, vector<32x256xf32>,
    return
  }
  func.func @transform_0(%arg0: i32) -> (i32, i32) {
    %c0_i32 = arith.constant 0 : i32
    %c0_i32_0 = arith.constant 0 : i32
    %c0_i32_1 = arith.constant 0 : i32
    return %c0_i32, %c0_i32_0 : i32, i32
  }
  func.func @transform_1(%arg0: i32) -> (i32, i32) {
    %c0_i32 = arith.constant 0 : i32
    %c0_i32_0 = arith.constant 0 : i32
    %c0_i32_1 = arith.constant 0 : i32
    return %c0_i32, %c0_i32_0 : i32, i32
  }
  func.func @transform_2(%arg0: i32) -> (i32, i32) {
    %c0_i32 = arith.constant 0 : i32
    %c0_i32_0 = arith.constant 0 : i32
    %c0_i32_1 = arith.constant 0 : i32
    return %c0_i32, %c0_i32_0 : i32, i32
  }
  func.func @transform_3(%arg0: i32) -> (i32, i32) {
    %c0_i32 = arith.constant 0 : i32
    %c0_i32_0 = arith.constant 0 : i32
    %c0_i32_1 = arith.constant 0 : i32
    return %c0_i32, %c0_i32_0 : i32, i32
  }
  func.func @transform_4(%arg0: i32) -> (i32, i32) {
    %c0_i32 = arith.constant 0 : i32
    %c0_i32_0 = arith.constant 0 : i32
    %c0_i32_1 = arith.constant 0 : i32
    return %c0_i32, %c0_i32_0 : i32, i32
  }
  func.func @transform_5(%arg0: i32) -> (i32, i32) {
    %c0_i32 = arith.constant 0 : i32
    %c0_i32_0 = arith.constant 0 : i32
    %c0_i32_1 = arith.constant 0 : i32
    return %c0_i32, %c0_i32_0 : i32, i32
  }
  func.func @transform_6(%arg0: i32) -> (i32, i32) {
    %c0_i32 = arith.constant 0 : i32
    %c0_i32_0 = arith.constant 0 : i32
    %c0_i32_1 = arith.constant 0 : i32
    return %c0_i32, %c0_i32_0 : i32, i32
  }
  func.func @transform_7(%arg0: i32) -> (i32, i32) {
    %c0_i32 = arith.constant 0 : i32
    %c0_i32_0 = arith.constant 0 : i32
    %c0_i32_1 = arith.constant 0 : i32
    return %c0_i32, %c0_i32_0 : i32, i32
  }
  func.func @transform_8(%arg0: i32) -> (i32, i32) {
    %c0_i32 = arith.constant 0 : i32
    %c0_i32_0 = arith.constant 0 : i32
    %c0_i32_1 = arith.constant 0 : i32
    return %c0_i32, %c0_i32_0 : i32, i32
  }
  func.func @transform_9(%arg0: i32) -> (i32, i32) {
    %c0_i32 = arith.constant 0 : i32
    %c0_i32_0 = arith.constant 0 : i32
    %c0_i32_1 = arith.constant 0 : i32
    return %c0_i32, %c0_i32_0 : i32, i32
  }
  func.func @transform_10(%arg0: i32) -> (i32, i32) {
    %c0_i32 = arith.constant 0 : i32
    %c0_i32_0 = arith.constant 0 : i32
    %c0_i32_1 = arith.constant 0 : i32
    return %c0_i32, %c0_i32_0 : i32, i32
  }
  func.func @transform_11(%arg0: i32) -> (i32, i32) {
    %c0_i32 = arith.constant 0 : i32
    %c0_i32_0 = arith.constant 0 : i32
    %c0_i32_1 = arith.constant 0 : i32
    return %c0_i32, %c0_i32_0 : i32, i32
  }
  func.func @transform_12(%arg0: i32) -> (i32, i32) {
    %c0_i32 = arith.constant 0 : i32
    %c0_i32_0 = arith.constant 0 : i32
    %c0_i32_1 = arith.constant 0 : i32
    return %c0_i32, %c0_i32_0 : i32, i32
  }
}

</mosaic_0001>

<llo_original>
// kernel: upblock_forward.1
$region0: #{upblock_forward.1}
  #allocation0 [shape = 'u32[]', space=smem, size = 0x4, offset = 0x4, fixed_abs, tag = 'smem constant byte address 0x4 - core index']
  #allocation1 [shape = 'u32[72,128]{1,0:T(1,128)}', space=vmem, size = 0x9000, scoped, tag = 'internal scratch']
  %s0 = inlined_call_operand.vmem [shape: f32[32,128], index: 0, kind: input, shape index: {}]
  %s1 = inlined_call_operand.vmem [shape: f32[32,32], index: 1, kind: input, shape index: {}]
  %s2 = inlined_call_operand.hbm [shape: f32[32,32], index: 2, kind: input, shape index: {}]
  %s3 = inlined_call_operand.hbm [shape: f32[2,64], index: 3, kind: input, shape index: {}]
  %s4 = inlined_call_operand.vmem [shape: f32[384,128], index: 4, kind: input, shape index: {}]
  %s5 = inlined_call_operand.hbm [shape: f32[128,256], index: 5, kind: input, shape index: {}]
  %s6 = inlined_call_operand.hbm [shape: f32[1,128], index: 6, kind: input, shape index: {}]
  %s7 = inlined_call_operand.hbm [shape: f32[1,128], index: 7, kind: input, shape index: {}]
  %s8 = inlined_call_operand.vmem [shape: f32[128,128], index: 8, kind: input, shape index: {}]
  %s9 = inlined_call_operand.hbm [shape: f32[1,256], index: 9, kind: input, shape index: {}]
  %s10 = inlined_call_operand.hbm [shape: f32[1,256], index: 10, kind: input, shape index: {}]
  %s11 = inlined_call_operand.vmem [shape: f32[256,256], index: 11, kind: input, shape index: {}]
  %s12 = inlined_call_operand.vmem [shape: f32[32,256], index: 12, kind: output, shape index: {}]
  %s13 = sld [smem:[#allocation0]]
  $region86: #{upblock_forward.1} parent=0
    _
  %s15 = ssub.s32 1, %s13
  %s16 = scalar_select 0, %s15, %s13
  $region1: #{upblock_forward.1} parent=0
    #allocation2 [shape = 'u8[16384]{0}', space=vmem, size = 0x4000, scoped, tag = 'input window, operand 2, single buffered']
    #allocation3 [shape = 's32[1]{0}', space=sflag, size = 0x4, scoped, tag = 'scoped memory for upblock_forward.1']
    #allocation4 [shape = 'u8[1024]{0}', space=vmem, size = 0x400, scoped, tag = 'input window, operand 3, single buffered']
    #allocation5 [shape = 's32[1]{0}', space=sflag, size = 0x4, scoped, tag = 'scoped memory for upblock_forward.1']
    #allocation6 [shape = 'u8[131072]{0}', space=vmem, size = 0x20000, scoped, tag = 'input window, operand 5, single buffered']
    #allocation7 [shape = 'u8[512]{0}', space=vmem, size = 0x400, scoped, tag = 'input window, operand 6, single buffered']
    #allocation8 [shape = 's32[1]{0}', space=sflag, size = 0x4, scoped, tag = 'scoped memory for upblock_forward.1']
    #allocation9 [shape = 'u8[512]{0}', space=vmem, size = 0x400, scoped, tag = 'input window, operand 7, single buffered']
    #allocation10 [shape = 'u8[1024]{0}', space=vmem, size = 0x400, scoped, tag = 'input window, operand 9, single buffered']
    #allocation11 [shape = 's32[1]{0}', space=sflag, size = 0x4, scoped, tag = 'scoped memory for upblock_forward.1']
    #allocation12 [shape = 'u8[1024]{0}', space=vmem, size = 0x400, scoped, tag = 'input window, operand 10, single buffered']
    %17 = vsyncpa [#allocation3], 0
    %18 = vsyncpa [#allocation5], 0
    %19 = vsyncpa [#allocation8], 0
    %20 = vsyncpa [#allocation11], 0
    // Predicated region
    $region2: #{upblock_forward.1} parent=1 // pred_check
      _
    $region3: #{upblock_forward.1} parent=1 // pred_check_branch
      %22 = sbr.rel (0) target = $region5
    $region4: #{upblock_forward.1} parent=1 // pred_region
      _
    $region5: #{upblock_forward.1} parent=1 // pred_fallthru
      _
    // Predicated region
    $region6: #{upblock_forward.1} parent=1 // pred_check
      _
    $region7: #{upblock_forward.1} parent=1 // pred_check_branch
      %24 = sbr.rel (0) target = $region9
    $region8: #{upblock_forward.1} parent=1 // pred_region
      _
    $region9: #{upblock_forward.1} parent=1 // pred_fallthru
      _
    // Predicated region
    $region10: #{upblock_forward.1} parent=1 // pred_check
      _
    $region11: #{upblock_forward.1} parent=1 // pred_check_branch
      %26 = sbr.rel (0) target = $region13
    $region12: #{upblock_forward.1} parent=1 // pred_region
      %28 = vsyncadd [#allocation3], 0
      %s29 = sshll.u32 %s2, 4
      %s30 = int_to_ptr.hbm [resolvable:$true] %s29
      %s31 = sshll.u32 [#allocation2], 4
      %s32 = int_to_ptr.vmem [resolvable:$true] %s31
      %37 = dma.hbm_to_vmem [thread:$0]  %s30, 512, %s32, [#allocation3], 128, 128, 8
    $region13: #{upblock_forward.1} parent=1 // pred_fallthru
      _
    // Predicated region
    $region14: #{upblock_forward.1} parent=1 // pred_check
      _
    $region15: #{upblock_forward.1} parent=1 // pred_check_branch
      %39 = sbr.rel (0) target = $region17
    $region16: #{upblock_forward.1} parent=1 // pred_region
      %41 = vsyncadd [#allocation5], 0
      %s43 = sshll.u32 %s3, 4
      %s44 = int_to_ptr.hbm [resolvable:$true] %s43
      %s45 = sshll.u32 [#allocation4], 4
      %s46 = int_to_ptr.vmem [resolvable:$true] %s45
      %48 = dma.hbm_to_vmem [thread:$0]  %s44, 32, %s46, [#allocation5]
    $region17: #{upblock_forward.1} parent=1 // pred_fallthru
      _
    // Predicated region
    $region18: #{upblock_forward.1} parent=1 // pred_check
      _
    $region19: #{upblock_forward.1} parent=1 // pred_check_branch
      %50 = sbr.rel (0) target = $region21
    $region20: #{upblock_forward.1} parent=1 // pred_region
      _
    $region21: #{upblock_forward.1} parent=1 // pred_fallthru
      _
    // Predicated region
    $region22: #{upblock_forward.1} parent=1 // pred_check
      _
    $region23: #{upblock_forward.1} parent=1 // pred_check_branch
      %52 = sbr.rel (0) target = $region25
    $region24: #{upblock_forward.1} parent=1 // pred_region
      %54 = vsyncadd [#allocation5], 0
      %s55 = sshll.u32 %s5, 4
      %s56 = int_to_ptr.hbm [resolvable:$true] %s55
      %s57 = sshll.u32 [#allocation6], 4
      %s58 = int_to_ptr.vmem [resolvable:$true] %s57
      %63 = dma.hbm_to_vmem [thread:$0]  %s56, 4096, %s58, [#allocation5], 256, 256, 16
    $region25: #{upblock_forward.1} parent=1 // pred_fallthru
      _
    // Predicated region
    $region26: #{upblock_forward.1} parent=1 // pred_check
      _
    $region27: #{upblock_forward.1} parent=1 // pred_check_branch
      %65 = sbr.rel (0) target = $region29
    $region28: #{upblock_forward.1} parent=1 // pred_region
      %67 = vsyncadd [#allocation8], 0
      %s69 = sshll.u32 %s6, 4
      %s70 = int_to_ptr.hbm [resolvable:$true] %s69
      %s71 = sshll.u32 [#allocation7], 4
      %s72 = int_to_ptr.vmem [resolvable:$true] %s71
      %74 = dma.hbm_to_vmem [thread:$0]  %s70, 16, %s72, [#allocation8]
    $region29: #{upblock_forward.1} parent=1 // pred_fallthru
      _
    // Predicated region
    $region30: #{upblock_forward.1} parent=1 // pred_check
      _
    $region31: #{upblock_forward.1} parent=1 // pred_check_branch
      %76 = sbr.rel (0) target = $region33
    $region32: #{upblock_forward.1} parent=1 // pred_region
      %78 = vsyncadd [#allocation8], 0
      %s80 = sshll.u32 %s7, 4
      %s81 = int_to_ptr.hbm [resolvable:$true] %s80
      %s82 = sshll.u32 [#allocation9], 4
      %s83 = int_to_ptr.vmem [resolvable:$true] %s82
      %85 = dma.hbm_to_vmem [thread:$0]  %s81, 16, %s83, [#allocation8]
    $region33: #{upblock_forward.1} parent=1 // pred_fallthru
      _
    // Predicated region
    $region34: #{upblock_forward.1} parent=1 // pred_check
      _
    $region35: #{upblock_forward.1} parent=1 // pred_check_branch
      %87 = sbr.rel (0) target = $region37
    $region36: #{upblock_forward.1} parent=1 // pred_region
      _
    $region37: #{upblock_forward.1} parent=1 // pred_fallthru
      _
    // Predicated region
    $region38: #{upblock_forward.1} parent=1 // pred_check
      _
    $region39: #{upblock_forward.1} parent=1 // pred_check_branch
      %89 = sbr.rel (0) target = $region41
    $region40: #{upblock_forward.1} parent=1 // pred_region
      %91 = vsyncadd [#allocation11], 0
      %s93 = sshll.u32 %s9, 4
      %s94 = int_to_ptr.hbm [resolvable:$true] %s93
      %s95 = sshll.u32 [#allocation10], 4
      %s96 = int_to_ptr.vmem [resolvable:$true] %s95
      %98 = dma.hbm_to_vmem [thread:$0]  %s94, 32, %s96, [#allocation11]
    $region41: #{upblock_forward.1} parent=1 // pred_fallthru
      _
    // Predicated region
    $region42: #{upblock_forward.1} parent=1 // pred_check
      _
    $region43: #{upblock_forward.1} parent=1 // pred_check_branch
      %100 = sbr.rel (0) target = $region45
    $region44: #{upblock_forward.1} parent=1 // pred_region
      %102 = vsyncadd [#allocation11], 0
      %s104 = sshll.u32 %s10, 4
      %s105 = int_to_ptr.hbm [resolvable:$true] %s104
      %s106 = sshll.u32 [#allocation12], 4
      %s107 = int_to_ptr.vmem [resolvable:$true] %s106
      %109 = dma.hbm_to_vmem [thread:$0]  %s105, 32, %s107, [#allocation11]
    $region45: #{upblock_forward.1} parent=1 // pred_fallthru
      _
    // Predicated region
    $region46: #{upblock_forward.1} parent=1 // pred_check
      _
    $region47: #{upblock_forward.1} parent=1 // pred_check_branch
      %111 = sbr.rel (0) target = $region49
    $region48: #{upblock_forward.1} parent=1 // pred_region
      _
    $region49: #{upblock_forward.1} parent=1 // pred_fallthru
      _
    // Predicated region
    $region50: #{upblock_forward.1} parent=1 // pred_check
      _
    $region51: #{upblock_forward.1} parent=1 // pred_check_branch
      %113 = sbr.rel (0) target = $region53
    $region52: #{upblock_forward.1} parent=1 // pred_region
      %115 = dma.done [#allocation3], 512
    $region53: #{upblock_forward.1} parent=1 // pred_fallthru
      _
    // Predicated region
    $region54: #{upblock_forward.1} parent=1 // pred_check
      _
    $region55: #{upblock_forward.1} parent=1 // pred_check_branch
      %117 = sbr.rel (0) target = $region57
    $region56: #{upblock_forward.1} parent=1 // pred_region
      %119 = dma.done [#allocation5], 32
    $region57: #{upblock_forward.1} parent=1 // pred_fallthru
      _
    // Predicated region
    $region58: #{upblock_forward.1} parent=1 // pred_check
      _
    $region59: #{upblock_forward.1} parent=1 // pred_check_branch
      %121 = sbr.rel (0) target = $region61
    $region60: #{upblock_forward.1} parent=1 // pred_region
      %123 = dma.done [#allocation5], 4096
    $region61: #{upblock_forward.1} parent=1 // pred_fallthru
      _
    // Predicated region
    $region62: #{upblock_forward.1} parent=1 // pred_check
      _
    $region63: #{upblock_forward.1} parent=1 // pred_check_branch
      %125 = sbr.rel (0) target = $region65
    $region64: #{upblock_forward.1} parent=1 // pred_region
      %127 = dma.done [#allocation8], 16
    $region65: #{upblock_forward.1} parent=1 // pred_fallthru
      _
    // Predicated region
    $region66: #{upblock_forward.1} parent=1 // pred_check
      _
    $region67: #{upblock_forward.1} parent=1 // pred_check_branch
      %129 = sbr.rel (0) target = $region69
    $region68: #{upblock_forward.1} parent=1 // pred_region
      %131 = dma.done [#allocation8], 16
    $region69: #{upblock_forward.1} parent=1 // pred_fallthru
      _
    // Predicated region
    $region70: #{upblock_forward.1} parent=1 // pred_check
      _
    $region71: #{upblock_forward.1} parent=1 // pred_check_branch
      %133 = sbr.rel (0) target = $region73
    $region72: #{upblock_forward.1} parent=1 // pred_region
      %135 = dma.done [#allocation11], 32
    $region73: #{upblock_forward.1} parent=1 // pred_fallthru
      _
    // Predicated region
    $region74: #{upblock_forward.1} parent=1 // pred_check
      _
    $region75: #{upblock_forward.1} parent=1 // pred_check_branch
      %137 = sbr.rel (0) target = $region77
    $region76: #{upblock_forward.1} parent=1 // pred_region
      %139 = dma.done [#allocation11], 32
    $region77: #{upblock_forward.1} parent=1 // pred_fallthru
      _
    %v140 = vld [vmem:[%s0] sm:$0xff]
    %v141 = vld [vmem:[%s0 + $0x8] sm:$0xff]
    %v142 = vld [vmem:[%s0 + $0x10] sm:$0xff]
    %v143 = vld [vmem:[%s0 + $0x18] sm:$0xff]
    %v144 = vld [vmem:[#allocation4] sm:$0x3]
    %v145 = vld [vmem:[%s1] sm:$0xff]
    %v146 = vld [vmem:[%s1 + $0x8] sm:$0xff]
    %v147 = vld [vmem:[%s1 + $0x10] sm:$0xff]
    %v148 = vld [vmem:[%s1 + $0x18] sm:$0xff]
    %vm149 = vcmask 261120
    %v151 = vsel %vm149, %v145, 0
    %v154 = vsel %vm149, %v146, 0
    %v157 = vsel %vm149, %v147, 0
    %v160 = vsel %vm149, %v148, 0
    %162 = vmatpush.msra.mxu0 0.0
    %163 = vmatpush.msra.mxu0 0.0
    %164 = vmatpush.msra.mxu0 0.0
    %165 = vmatpush.msra.mxu0 0.0
    %166 = vmatpush.msra.mxu0 0.0
    %167 = vmatpush.msra.mxu0 0.0
    %168 = vmatpush.msra.mxu0 0.0
    %169 = vmatpush.msra.mxu0 0.0
    %170 = vmatpush.msra.mxu0 0.0
    %171 = vmatpush.msra.mxu0 0.0
    %172 = vmatpush.msra.mxu0 0.0
    %173 = vmatpush.msra.mxu0 0.0
    %174 = vmatpush.msra.mxu0 %v143
    %175 = vmatpush.msra.mxu0 %v142
    %176 = vmatpush.msra.mxu0 %v141
    %177 = vmatpush.msra.mxu0 %v140
    %178 = vmatmul.f32.gmra.mxu0 %v151
    %v179 = vpop.f32.mrf.mxu0
    %v180 = vadd.f32 0.0, %v179
    %181 = vmatmul.f32.gmra.mxu0 %v154
    %v182 = vpop.f32.mrf.mxu0
    %v183 = vadd.f32 0.0, %v182
    %184 = vmatmul.f32.gmra.mxu0 %v157
    %v185 = vpop.f32.mrf.mxu0
    %v186 = vadd.f32 0.0, %v185
    %187 = vmatmul.f32.gmra.mxu0 %v160
    %v188 = vpop.f32.mrf.mxu0
    %v189 = vadd.f32 0.0, %v188
    %190 = vdwg.mxu0
    %v191 = vld [vmem:[#allocation2] sm:$0xff]
    %v192 = vld [vmem:[#allocation2 + $0x8] sm:$0xff]
    %v193 = vld [vmem:[#allocation2 + $0x10] sm:$0xff]
    %v194 = vld [vmem:[#allocation2 + $0x18] sm:$0xff]
    %v196 = vsel %vm149, %v191, 0
    %v199 = vsel %vm149, %v192, 0
    %v202 = vsel %vm149, %v193, 0
    %v205 = vsel %vm149, %v194, 0
    %207 = vmatpush.msra.mxu0 0.0
    %208 = vmatpush.msra.mxu0 0.0
    %209 = vmatpush.msra.mxu0 0.0
    %210 = vmatpush.msra.mxu0 0.0
    %211 = vmatpush.msra.mxu0 0.0
    %212 = vmatpush.msra.mxu0 0.0
    %213 = vmatpush.msra.mxu0 0.0
    %214 = vmatpush.msra.mxu0 0.0
    %215 = vmatpush.msra.mxu0 0.0
    %216 = vmatpush.msra.mxu0 0.0
    %217 = vmatpush.msra.mxu0 0.0
    %218 = vmatpush.msra.mxu0 0.0
    %219 = vmatpush.msra.mxu0 %v143
    %220 = vmatpush.msra.mxu0 %v142
    %221 = vmatpush.msra.mxu0 %v141
    %222 = vmatpush.msra.mxu0 %v140
    %223 = vmatmul.f32.gmra.mxu0 %v196
    %v224 = vpop.f32.mrf.mxu0
    %v225 = vadd.f32 0.0, %v224
    %226 = vmatmul.f32.gmra.mxu0 %v199
    %v227 = vpop.f32.mrf.mxu0
    %v228 = vadd.f32 0.0, %v227
    %229 = vmatmul.f32.gmra.mxu0 %v202
    %v230 = vpop.f32.mrf.mxu0
    %v231 = vadd.f32 0.0, %v230
    %232 = vmatmul.f32.gmra.mxu0 %v205
    %v233 = vpop.f32.mrf.mxu0
    %v234 = vadd.f32 0.0, %v233
    %235 = vdwg.mxu0
    %v236 = vld [vmem:[%s4] sm:$0xff]
    %v237 = vld [vmem:[%s4 + $0x8] sm:$0xff]
    %v238 = vld [vmem:[%s4 + $0x10] sm:$0xff]
    %v239 = vld [vmem:[%s4 + $0x18] sm:$0xff]
    %v240 = vld [vmem:[%s4 + $0x20] sm:$0xff]
    %v241 = vld [vmem:[%s4 + $0x28] sm:$0xff]
    %v242 = vld [vmem:[%s4 + $0x30] sm:$0xff]
    %v243 = vld [vmem:[%s4 + $0x38] sm:$0xff]
    %v244 = vld [vmem:[%s4 + $0x40] sm:$0xff]
    %v245 = vld [vmem:[%s4 + $0x48] sm:$0xff]
    %v246 = vld [vmem:[%s4 + $0x50] sm:$0xff]
    %v247 = vld [vmem:[%s4 + $0x58] sm:$0xff]
    %v248 = vld [vmem:[%s4 + $0x60] sm:$0xff]
    %v249 = vld [vmem:[%s4 + $0x68] sm:$0xff]
    %v250 = vld [vmem:[%s4 + $0x70] sm:$0xff]
    %v251 = vld [vmem:[%s4 + $0x78] sm:$0xff]
    %v252 = vld [vmem:[%s4 + $0x80] sm:$0xff]
    %v253 = vld [vmem:[%s4 + $0x88] sm:$0xff]
    %v254 = vld [vmem:[%s4 + $0x90] sm:$0xff]
    %v255 = vld [vmem:[%s4 + $0x98] sm:$0xff]
    %v256 = vld [vmem:[%s4 + $0xa0] sm:$0xff]
    %v257 = vld [vmem:[%s4 + $0xa8] sm:$0xff]
    %v258 = vld [vmem:[%s4 + $0xb0] sm:$0xff]
    %v259 = vld [vmem:[%s4 + $0xb8] sm:$0xff]
    %v260 = vld [vmem:[%s4 + $0xc0] sm:$0xff]
    %v261 = vld [vmem:[%s4 + $0xc8] sm:$0xff]
    %v262 = vld [vmem:[%s4 + $0xd0] sm:$0xff]
    %v263 = vld [vmem:[%s4 + $0xd8] sm:$0xff]
    %v264 = vld [vmem:[%s4 + $0xe0] sm:$0xff]
    %v265 = vld [vmem:[%s4 + $0xe8] sm:$0xff]
    %v266 = vld [vmem:[%s4 + $0xf0] sm:$0xff]
    %v267 = vld [vmem:[%s4 + $0xf8] sm:$0xff]
    %v268 = vld [vmem:[%s4 + $0x100] sm:$0xff]
    %v269 = vld [vmem:[%s4 + $0x108] sm:$0xff]
    %v270 = vld [vmem:[%s4 + $0x110] sm:$0xff]
    %v271 = vld [vmem:[%s4 + $0x118] sm:$0xff]
    %v272 = vld [vmem:[%s4 + $0x120] sm:$0xff]
    %v273 = vld [vmem:[%s4 + $0x128] sm:$0xff]
    %v274 = vld [vmem:[%s4 + $0x130] sm:$0xff]
    %v275 = vld [vmem:[%s4 + $0x138] sm:$0xff]
    %v276 = vld [vmem:[%s4 + $0x140] sm:$0xff]
    %v277 = vld [vmem:[%s4 + $0x148] sm:$0xff]
    %v278 = vld [vmem:[%s4 + $0x150] sm:$0xff]
    %v279 = vld [vmem:[%s4 + $0x158] sm:$0xff]
    %v280 = vld [vmem:[%s4 + $0x160] sm:$0xff]
    %v281 = vld [vmem:[%s4 + $0x168] sm:$0xff]
    %v282 = vld [vmem:[%s4 + $0x170] sm:$0xff]
    %v283 = vld [vmem:[%s4 + $0x178] sm:$0xff]
    %284 = vmatpush.msra.mxu0 %v251
    %285 = vmatpush.msra.mxu0 %v250
    %286 = vmatpush.msra.mxu0 %v249
    %287 = vmatpush.msra.mxu0 %v248
    %288 = vmatpush.msra.mxu0 %v247
    %289 = vmatpush.msra.mxu0 %v246
    %290 = vmatpush.msra.mxu0 %v245
    %291 = vmatpush.msra.mxu0 %v244
    %292 = vmatpush.msra.mxu0 %v243
    %293 = vmatpush.msra.mxu0 %v242
    %294 = vmatpush.msra.mxu0 %v241
    %295 = vmatpush.msra.mxu0 %v240
    %296 = vmatpush.msra.mxu0 %v239
    %297 = vmatpush.msra.mxu0 %v238
    %298 = vmatpush.msra.mxu0 %v237
    %299 = vmatpush.msra.mxu0 %v236
    %300 = vmatmul.f32.gmra.mxu0 %v180
    %v301 = vpop.f32.mrf.mxu0
    %v302 = vadd.f32 0.0, %v301
    %303 = vmatmul.f32.gmra.mxu0 %v183
    %v304 = vpop.f32.mrf.mxu0
    %v305 = vadd.f32 0.0, %v304
    %306 = vmatmul.f32.gmra.mxu0 %v186
    %v307 = vpop.f32.mrf.mxu0
    %v308 = vadd.f32 0.0, %v307
    %309 = vmatmul.f32.gmra.mxu0 %v189
    %v310 = vpop.f32.mrf.mxu0
    %v311 = vadd.f32 0.0, %v310
    %312 = vdwg.mxu0
    %313 = vmatpush.msra.mxu0 %v267
    %314 = vmatpush.msra.mxu0 %v266
    %315 = vmatpush.msra.mxu0 %v265
    %316 = vmatpush.msra.mxu0 %v264
    %317 = vmatpush.msra.mxu0 %v263
    %318 = vmatpush.msra.mxu0 %v262
    %319 = vmatpush.msra.mxu0 %v261
    %320 = vmatpush.msra.mxu0 %v260
    %321 = vmatpush.msra.mxu0 %v259
    %322 = vmatpush.msra.mxu0 %v258
    %323 = vmatpush.msra.mxu0 %v257
    %324 = vmatpush.msra.mxu0 %v256
    %325 = vmatpush.msra.mxu0 %v255
    %326 = vmatpush.msra.mxu0 %v254
    %327 = vmatpush.msra.mxu0 %v253
    %328 = vmatpush.msra.mxu0 %v252
    %329 = vmatmul.f32.gmra.mxu0 %v140
    %v330 = vpop.f32.mrf.mxu0
    %v331 = vadd.f32 %v302, %v330
    %332 = vmatmul.f32.gmra.mxu0 %v141
    %v333 = vpop.f32.mrf.mxu0
    %v334 = vadd.f32 %v305, %v333
    %335 = vmatmul.f32.gmra.mxu0 %v142
    %v336 = vpop.f32.mrf.mxu0
    %v337 = vadd.f32 %v308, %v336
    %338 = vmatmul.f32.gmra.mxu0 %v143
    %v339 = vpop.f32.mrf.mxu0
    %v340 = vadd.f32 %v311, %v339
    %341 = vdwg.mxu0
    %342 = vmatpush.msra.mxu0 %v283
    %343 = vmatpush.msra.mxu0 %v282
    %344 = vmatpush.msra.mxu0 %v281
    %345 = vmatpush.msra.mxu0 %v280
    %346 = vmatpush.msra.mxu0 %v279
    %347 = vmatpush.msra.mxu0 %v278
    %348 = vmatpush.msra.mxu0 %v277
    %349 = vmatpush.msra.mxu0 %v276
    %350 = vmatpush.msra.mxu0 %v275
    %351 = vmatpush.msra.mxu0 %v274
    %352 = vmatpush.msra.mxu0 %v273
    %353 = vmatpush.msra.mxu0 %v272
    %354 = vmatpush.msra.mxu0 %v271
    %355 = vmatpush.msra.mxu0 %v270
    %356 = vmatpush.msra.mxu0 %v269
    %357 = vmatpush.msra.mxu0 %v268
    %358 = vmatmul.f32.gmra.mxu0 %v225
    %v359 = vpop.f32.mrf.mxu0
    %v360 = vadd.f32 %v331, %v359
    %361 = vmatmul.f32.gmra.mxu0 %v228
    %v362 = vpop.f32.mrf.mxu0
    %v363 = vadd.f32 %v334, %v362
    %364 = vmatmul.f32.gmra.mxu0 %v231
    %v365 = vpop.f32.mrf.mxu0
    %v366 = vadd.f32 %v337, %v365
    %367 = vmatmul.f32.gmra.mxu0 %v234
    %v368 = vpop.f32.mrf.mxu0
    %v369 = vadd.f32 %v340, %v368
    %370 = vdwg.mxu0
    %v371 = vld [vmem:[%s8] sm:$0xff]
    %v372 = vld [vmem:[%s8 + $0x8] sm:$0xff]
    %v373 = vld [vmem:[%s8 + $0x10] sm:$0xff]
    %v374 = vld [vmem:[%s8 + $0x18] sm:$0xff]
    %v375 = vld [vmem:[%s8 + $0x20] sm:$0xff]
    %v376 = vld [vmem:[%s8 + $0x28] sm:$0xff]
    %v377 = vld [vmem:[%s8 + $0x30] sm:$0xff]
    %v378 = vld [vmem:[%s8 + $0x38] sm:$0xff]
    %v379 = vld [vmem:[%s8 + $0x40] sm:$0xff]
    %v380 = vld [vmem:[%s8 + $0x48] sm:$0xff]
    %v381 = vld [vmem:[%s8 + $0x50] sm:$0xff]
    %v382 = vld [vmem:[%s8 + $0x58] sm:$0xff]
    %v383 = vld [vmem:[%s8 + $0x60] sm:$0xff]
    %v384 = vld [vmem:[%s8 + $0x68] sm:$0xff]
    %v385 = vld [vmem:[%s8 + $0x70] sm:$0xff]
    %v386 = vld [vmem:[%s8 + $0x78] sm:$0xff]
    %v387 = vld [vmem:[#allocation7] sm:$0x1]
    %v388 = vld [vmem:[#allocation9] sm:$0x1]
    %v389 = vmul.f32 %v360, %v360
    %v390 = vmul.f32 %v363, %v363
    %v391 = vmul.f32 %v366, %v366
    %v392 = vmul.f32 %v369, %v369
    %vm393 = vcmask 523264
    %v395 = vsel %vm393, %v144, 0
    %397 = vmatpush.msra.mxu0 0.0
    %398 = vmatpush.msra.mxu0 0.0
    %399 = vmatpush.msra.mxu0 0.0
    %400 = vmatpush.msra.mxu0 0.0
    %401 = vmatpush.msra.mxu0 0.0
    %402 = vmatpush.msra.mxu0 0.0
    %403 = vmatpush.msra.mxu0 0.0
    %404 = vmatpush.msra.mxu0 0.0
    %405 = vmatpush.msra.mxu0 %v392
    %406 = vmatpush.msra.mxu0 %v391
    %407 = vmatpush.msra.mxu0 %v390
    %408 = vmatpush.msra.mxu0 %v389
    %409 = vmatpush.msra.mxu0 %v369
    %410 = vmatpush.msra.mxu0 %v366
    %411 = vmatpush.msra.mxu0 %v363
    %412 = vmatpush.msra.mxu0 %v360
    %413 = vmatmul.f32.gmra.mxu0 %v395
    %v414 = vpop.f32.mrf.mxu0
    %v415 = vadd.f32 0.0, %v414
    %416 = vdwg.mxu0
    %417 = vmatpush.msra.mxu0 %v386
    %418 = vmatpush.msra.mxu0 %v385
    %419 = vmatpush.msra.mxu0 %v384
    %420 = vmatpush.msra.mxu0 %v383
    %421 = vmatpush.msra.mxu0 %v382
    %422 = vmatpush.msra.mxu0 %v381
    %423 = vmatpush.msra.mxu0 %v380
    %424 = vmatpush.msra.mxu0 %v379
    %425 = vmatpush.msra.mxu0 %v378
    %426 = vmatpush.msra.mxu0 %v377
    %427 = vmatpush.msra.mxu0 %v376
    %428 = vmatpush.msra.mxu0 %v375
    %429 = vmatpush.msra.mxu0 %v374
    %430 = vmatpush.msra.mxu0 %v373
    %431 = vmatpush.msra.mxu0 %v372
    %432 = vmatpush.msra.mxu0 %v371
    %433 = vmatmul.f32.gmra.mxu0 %v415
    %v434 = vpop.f32.mrf.mxu0
    %v435 = vadd.f32 0.0, %v434
    %436 = vdwg.mxu0
    %v437 = vmul.f32 %v435, 0.001953125
    %v438 = vmul.f32 %v437, %v437
    %v440 = vrot.slane %v438, 7
    %v442 = vsub.f32 %v437, %v440
    %v443 = vadd.f32 %v442, 1e-05
    %v444 = vrsqrt.pop %v443
    %v445 = vmul.f32 %v444, %v443
    %v446 = vmul.f32 %v445, %v444
    %v447 = vmul.f32 0.5, %v446
    %v448 = vsub.f32 1.5, %v447
    %v449 = vmul.f32 %v444, %v448
    %vm450 = vweird.f32 %v443
    %vm451 = vweird.f32 %v444
    %vm452 = vmor %vm450, %vm451
    %v453 = vsel %vm452, %v444, %v449
    %v454 = vperm.slane %v437, 0
    %v455 = vsub.f32 %v360, %v454
    %v456 = vsub.f32 %v363, %v454
    %v457 = vsub.f32 %v366, %v454
    %v458 = vsub.f32 %v369, %v454
    %v460 = vperm.slane %v387, 0
    %v462 = vmul.f32 %v453, %v460
    %v463 = vperm.slane %v462, 1
    %v464 = vmul.f32 %v455, %v463
    %v465 = vmul.f32 %v456, %v463
    %v466 = vmul.f32 %v457, %v463
    %v467 = vmul.f32 %v458, %v463
    %v469 = vperm.slane %v388, 0
    %v471 = vadd.f32 %v464, %v469
    %v472 = vadd.f32 %v465, %v469
    %v473 = vadd.f32 %v466, %v469
    %v474 = vadd.f32 %v467, %v469
    %v475 = vmax.f32 %v471, 0.0
    %v476 = vmax.f32 %v472, 0.0
    %v477 = vmax.f32 %v473, 0.0
    %v478 = vmax.f32 %v474, 0.0
    %v479 = vld [vmem:[#allocation6] sm:$0xff]
    %v480 = vld [vmem:[#allocation6 + $0x8] sm:$0xff]
    %v481 = vld [vmem:[#allocation6 + $0x10] sm:$0xff]
    %v482 = vld [vmem:[#allocation6 + $0x18] sm:$0xff]
    %v483 = vld [vmem:[#allocation6 + $0x20] sm:$0xff]
    %v484 = vld [vmem:[#allocation6 + $0x28] sm:$0xff]
    %v485 = vld [vmem:[#allocation6 + $0x30] sm:$0xff]
    %v486 = vld [vmem:[#allocation6 + $0x38] sm:$0xff]
    %v487 = vld [vmem:[#allocation6 + $0x40] sm:$0xff]
    %v488 = vld [vmem:[#allocation6 + $0x48] sm:$0xff]
    %v489 = vld [vmem:[#allocation6 + $0x50] sm:$0xff]
    %v490 = vld [vmem:[#allocation6 + $0x58] sm:$0xff]
    %v491 = vld [vmem:[#allocation6 + $0x60] sm:$0xff]
    %v492 = vld [vmem:[#allocation6 + $0x68] sm:$0xff]
    %v493 = vld [vmem:[#allocation6 + $0x70] sm:$0xff]
    %v494 = vld [vmem:[#allocation6 + $0x78] sm:$0xff]
    %v495 = vld [vmem:[#allocation6 + $0x80] sm:$0xff]
    %v496 = vld [vmem:[#allocation6 + $0x88] sm:$0xff]
    %v497 = vld [vmem:[#allocation6 + $0x90] sm:$0xff]
    %v498 = vld [vmem:[#allocation6 + $0x98] sm:$0xff]
    %v499 = vld [vmem:[#allocation6 + $0xa0] sm:$0xff]
    %v500 = vld [vmem:[#allocation6 + $0xa8] sm:$0xff]
    %v501 = vld [vmem:[#allocation6 + $0xb0] sm:$0xff]
    %v502 = vld [vmem:[#allocation6 + $0xb8] sm:$0xff]
    %v503 = vld [vmem:[#allocation6 + $0xc0] sm:$0xff]
    %v504 = vld [vmem:[#allocation6 + $0xc8] sm:$0xff]
    %v505 = vld [vmem:[#allocation6 + $0xd0] sm:$0xff]
    %v506 = vld [vmem:[#allocation6 + $0xd8] sm:$0xff]
    %v507 = vld [vmem:[#allocation6 + $0xe0] sm:$0xff]
    %v508 = vld [vmem:[#allocation6 + $0xe8] sm:$0xff]
    %v509 = vld [vmem:[#allocation6 + $0xf0] sm:$0xff]
    %v510 = vld [vmem:[#allocation6 + $0xf8] sm:$0xff]
    %511 = vmatpush.msra.mxu0 %v509
    %512 = vmatpush.msra.mxu0 %v507
    %513 = vmatpush.msra.mxu0 %v505
    %514 = vmatpush.msra.mxu0 %v503
    %515 = vmatpush.msra.mxu0 %v501
    %516 = vmatpush.msra.mxu0 %v499
    %517 = vmatpush.msra.mxu0 %v497
    %518 = vmatpush.msra.mxu0 %v495
    %519 = vmatpush.msra.mxu0 %v493
    %520 = vmatpush.msra.mxu0 %v491
    %521 = vmatpush.msra.mxu0 %v489
    %522 = vmatpush.msra.mxu0 %v487
    %523 = vmatpush.msra.mxu0 %v485
    %524 = vmatpush.msra.mxu0 %v483
    %525 = vmatpush.msra.mxu0 %v481
    %526 = vmatpush.msra.mxu0 %v479
    %527 = vmatmul.f32.gmra.mxu0 %v475
    %v528 = vpop.f32.mrf.mxu0
    %v529 = vadd.f32 0.0, %v528
    %530 = vmatmul.f32.gmra.mxu0 %v476
    %v531 = vpop.f32.mrf.mxu0
    %v532 = vadd.f32 0.0, %v531
    %533 = vmatmul.f32.gmra.mxu0 %v477
    %v534 = vpop.f32.mrf.mxu0
    %v535 = vadd.f32 0.0, %v534
    %536 = vmatmul.f32.gmra.mxu0 %v478
    %v537 = vpop.f32.mrf.mxu0
    %v538 = vadd.f32 0.0, %v537
    %539 = vdwg.mxu0
    %540 = vmatpush.msra.mxu0 %v510
    %541 = vmatpush.msra.mxu0 %v508
    %542 = vmatpush.msra.mxu0 %v506
    %543 = vmatpush.msra.mxu0 %v504
    %544 = vmatpush.msra.mxu0 %v502
    %545 = vmatpush.msra.mxu0 %v500
    %546 = vmatpush.msra.mxu0 %v498
    %547 = vmatpush.msra.mxu0 %v496
    %548 = vmatpush.msra.mxu0 %v494
    %549 = vmatpush.msra.mxu0 %v492
    %550 = vmatpush.msra.mxu0 %v490
    %551 = vmatpush.msra.mxu0 %v488
    %552 = vmatpush.msra.mxu0 %v486
    %553 = vmatpush.msra.mxu0 %v484
    %554 = vmatpush.msra.mxu0 %v482
    %555 = vmatpush.msra.mxu0 %v480
    %556 = vmatmul.f32.gmra.mxu0 %v475
    %v557 = vpop.f32.mrf.mxu0
    %v558 = vadd.f32 0.0, %v557
    %559 = vmatmul.f32.gmra.mxu0 %v476
    %v560 = vpop.f32.mrf.mxu0
    %v561 = vadd.f32 0.0, %v560
    %562 = vmatmul.f32.gmra.mxu0 %v477
    %v563 = vpop.f32.mrf.mxu0
    %v564 = vadd.f32 0.0, %v563
    %565 = vmatmul.f32.gmra.mxu0 %v478
    %v566 = vpop.f32.mrf.mxu0
    %v567 = vadd.f32 0.0, %v566
    %568 = vdwg.mxu0
    %v569 = vld [vmem:[%s11] sm:$0xff]
    %v570 = vld [vmem:[%s11 + $0x8] sm:$0xff]
    %v571 = vld [vmem:[%s11 + $0x10] sm:$0xff]
    %v572 = vld [vmem:[%s11 + $0x18] sm:$0xff]
    %v573 = vld [vmem:[%s11 + $0x20] sm:$0xff]
    %v574 = vld [vmem:[%s11 + $0x28] sm:$0xff]
    %v575 = vld [vmem:[%s11 + $0x30] sm:$0xff]
    %v576 = vld [vmem:[%s11 + $0x38] sm:$0xff]
    %v577 = vld [vmem:[%s11 + $0x40] sm:$0xff]
    %v578 = vld [vmem:[%s11 + $0x48] sm:$0xff]
    %v579 = vld [vmem:[%s11 + $0x50] sm:$0xff]
    %v580 = vld [vmem:[%s11 + $0x58] sm:$0xff]
    %v581 = vld [vmem:[%s11 + $0x60] sm:$0xff]
    %v582 = vld [vmem:[%s11 + $0x68] sm:$0xff]
    %v583 = vld [vmem:[%s11 + $0x70] sm:$0xff]
    %v584 = vld [vmem:[%s11 + $0x78] sm:$0xff]
    %v585 = vld [vmem:[%s11 + $0x80] sm:$0xff]
    %v586 = vld [vmem:[%s11 + $0x88] sm:$0xff]
    %v587 = vld [vmem:[%s11 + $0x90] sm:$0xff]
    %v588 = vld [vmem:[%s11 + $0x98] sm:$0xff]
    %v589 = vld [vmem:[%s11 + $0xa0] sm:$0xff]
    %v590 = vld [vmem:[%s11 + $0xa8] sm:$0xff]
    %v591 = vld [vmem:[%s11 + $0xb0] sm:$0xff]
    %v592 = vld [vmem:[%s11 + $0xb8] sm:$0xff]
    %v593 = vld [vmem:[%s11 + $0xc0] sm:$0xff]
    %v594 = vld [vmem:[%s11 + $0xc8] sm:$0xff]
    %v595 = vld [vmem:[%s11 + $0xd0] sm:$0xff]
    %v596 = vld [vmem:[%s11 + $0xd8] sm:$0xff]
    %v597 = vld [vmem:[%s11 + $0xe0] sm:$0xff]
    %v598 = vld [vmem:[%s11 + $0xe8] sm:$0xff]
    %v599 = vld [vmem:[%s11 + $0xf0] sm:$0xff]
    %v600 = vld [vmem:[%s11 + $0xf8] sm:$0xff]
    %v601 = vld [vmem:[%s11 + $0x100] sm:$0xff]
    %v602 = vld [vmem:[%s11 + $0x108] sm:$0xff]
    %v603 = vld [vmem:[%s11 + $0x110] sm:$0xff]
    %v604 = vld [vmem:[%s11 + $0x118] sm:$0xff]
    %v605 = vld [vmem:[%s11 + $0x120] sm:$0xff]
    %v606 = vld [vmem:[%s11 + $0x128] sm:$0xff]
    %v607 = vld [vmem:[%s11 + $0x130] sm:$0xff]
    %v608 = vld [vmem:[%s11 + $0x138] sm:$0xff]
    %v609 = vld [vmem:[%s11 + $0x140] sm:$0xff]
    %v610 = vld [vmem:[%s11 + $0x148] sm:$0xff]
    %v611 = vld [vmem:[%s11 + $0x150] sm:$0xff]
    %v612 = vld [vmem:[%s11 + $0x158] sm:$0xff]
    %v613 = vld [vmem:[%s11 + $0x160] sm:$0xff]
    %v614 = vld [vmem:[%s11 + $0x168] sm:$0xff]
    %v615 = vld [vmem:[%s11 + $0x170] sm:$0xff]
    %v616 = vld [vmem:[%s11 + $0x178] sm:$0xff]
    %v617 = vld [vmem:[%s11 + $0x180] sm:$0xff]
    %v618 = vld [vmem:[%s11 + $0x188] sm:$0xff]
    %v619 = vld [vmem:[%s11 + $0x190] sm:$0xff]
    %v620 = vld [vmem:[%s11 + $0x198] sm:$0xff]
    %v621 = vld [vmem:[%s11 + $0x1a0] sm:$0xff]
    %v622 = vld [vmem:[%s11 + $0x1a8] sm:$0xff]
    %v623 = vld [vmem:[%s11 + $0x1b0] sm:$0xff]
    %v624 = vld [vmem:[%s11 + $0x1b8] sm:$0xff]
    %v625 = vld [vmem:[%s11 + $0x1c0] sm:$0xff]
    %v626 = vld [vmem:[%s11 + $0x1c8] sm:$0xff]
    %v627 = vld [vmem:[%s11 + $0x1d0] sm:$0xff]
    %v628 = vld [vmem:[%s11 + $0x1d8] sm:$0xff]
    %v629 = vld [vmem:[%s11 + $0x1e0] sm:$0xff]
    %v630 = vld [vmem:[%s11 + $0x1e8] sm:$0xff]
    %v631 = vld [vmem:[%s11 + $0x1f0] sm:$0xff]
    %v632 = vld [vmem:[%s11 + $0x1f8] sm:$0xff]
    %v633 = vld [vmem:[#allocation10] sm:$0x3]
    %v634 = vld [vmem:[#allocation12] sm:$0x3]
    %v635 = vmul.f32 %v529, %v529
    %v636 = vmul.f32 %v558, %v558
    %v637 = vmul.f32 %v532, %v532
    %v638 = vmul.f32 %v561, %v561
    %v639 = vmul.f32 %v535, %v535
    %v640 = vmul.f32 %v564, %v564
    %v641 = vmul.f32 %v538, %v538
    %v642 = vmul.f32 %v567, %v567
    %643 = vmatpush.msra.mxu0 0.0
    %644 = vmatpush.msra.mxu0 0.0
    %645 = vmatpush.msra.mxu0 0.0
    %646 = vmatpush.msra.mxu0 0.0
    %647 = vmatpush.msra.mxu0 0.0
    %648 = vmatpush.msra.mxu0 0.0
    %649 = vmatpush.msra.mxu0 0.0
    %650 = vmatpush.msra.mxu0 0.0
    %651 = vmatpush.msra.mxu0 %v641
    %652 = vmatpush.msra.mxu0 %v639
    %653 = vmatpush.msra.mxu0 %v637
    %654 = vmatpush.msra.mxu0 %v635
    %655 = vmatpush.msra.mxu0 %v538
    %656 = vmatpush.msra.mxu0 %v535
    %657 = vmatpush.msra.mxu0 %v532
    %658 = vmatpush.msra.mxu0 %v529
    %659 = vmatmul.f32.gmra.mxu0 %v395
    %v660 = vpop.f32.mrf.mxu0
    %v661 = vadd.f32 0.0, %v660
    %662 = vdwg.mxu0
    %663 = vmatpush.msra.mxu0 0.0
    %664 = vmatpush.msra.mxu0 0.0
    %665 = vmatpush.msra.mxu0 0.0
    %666 = vmatpush.msra.mxu0 0.0
    %667 = vmatpush.msra.mxu0 0.0
    %668 = vmatpush.msra.mxu0 0.0
    %669 = vmatpush.msra.mxu0 0.0
    %670 = vmatpush.msra.mxu0 0.0
    %671 = vmatpush.msra.mxu0 %v642
    %672 = vmatpush.msra.mxu0 %v640
    %673 = vmatpush.msra.mxu0 %v638
    %674 = vmatpush.msra.mxu0 %v636
    %675 = vmatpush.msra.mxu0 %v567
    %676 = vmatpush.msra.mxu0 %v564
    %677 = vmatpush.msra.mxu0 %v561
    %678 = vmatpush.msra.mxu0 %v558
    %679 = vmatmul.f32.gmra.mxu0 %v395
    %v680 = vpop.f32.mrf.mxu0
    %v681 = vadd.f32 0.0, %v680
    %682 = vdwg.mxu0
    %683 = vmatpush.msra.mxu0 %v599
    %684 = vmatpush.msra.mxu0 %v597
    %685 = vmatpush.msra.mxu0 %v595
    %686 = vmatpush.msra.mxu0 %v593
    %687 = vmatpush.msra.mxu0 %v591
    %688 = vmatpush.msra.mxu0 %v589
    %689 = vmatpush.msra.mxu0 %v587
    %690 = vmatpush.msra.mxu0 %v585
    %691 = vmatpush.msra.mxu0 %v583
    %692 = vmatpush.msra.mxu0 %v581
    %693 = vmatpush.msra.mxu0 %v579
    %694 = vmatpush.msra.mxu0 %v577
    %695 = vmatpush.msra.mxu0 %v575
    %696 = vmatpush.msra.mxu0 %v573
    %697 = vmatpush.msra.mxu0 %v571
    %698 = vmatpush.msra.mxu0 %v569
    %699 = vmatmul.f32.gmra.mxu0 %v661
    %v700 = vpop.f32.mrf.mxu0
    %v701 = vadd.f32 0.0, %v700
    %702 = vdwg.mxu0
    %703 = vmatpush.msra.mxu0 %v631
    %704 = vmatpush.msra.mxu0 %v629
    %705 = vmatpush.msra.mxu0 %v627
    %706 = vmatpush.msra.mxu0 %v625
    %707 = vmatpush.msra.mxu0 %v623
    %708 = vmatpush.msra.mxu0 %v621
    %709 = vmatpush.msra.mxu0 %v619
    %710 = vmatpush.msra.mxu0 %v617
    %711 = vmatpush.msra.mxu0 %v615
    %712 = vmatpush.msra.mxu0 %v613
    %713 = vmatpush.msra.mxu0 %v611
    %714 = vmatpush.msra.mxu0 %v609
    %715 = vmatpush.msra.mxu0 %v607
    %716 = vmatpush.msra.mxu0 %v605
    %717 = vmatpush.msra.mxu0 %v603
    %718 = vmatpush.msra.mxu0 %v601
    %719 = vmatmul.f32.gmra.mxu0 %v681
    %v720 = vpop.f32.mrf.mxu0
    %v721 = vadd.f32 %v701, %v720
    %722 = vdwg.mxu0
    %723 = vmatpush.msra.mxu0 %v600
    %724 = vmatpush.msra.mxu0 %v598
    %725 = vmatpush.msra.mxu0 %v596
    %726 = vmatpush.msra.mxu0 %v594
    %727 = vmatpush.msra.mxu0 %v592
    %728 = vmatpush.msra.mxu0 %v590
    %729 = vmatpush.msra.mxu0 %v588
    %730 = vmatpush.msra.mxu0 %v586
    %731 = vmatpush.msra.mxu0 %v584
    %732 = vmatpush.msra.mxu0 %v582
    %733 = vmatpush.msra.mxu0 %v580
    %734 = vmatpush.msra.mxu0 %v578
    %735 = vmatpush.msra.mxu0 %v576
    %736 = vmatpush.msra.mxu0 %v574
    %737 = vmatpush.msra.mxu0 %v572
    %738 = vmatpush.msra.mxu0 %v570
    %739 = vmatmul.f32.gmra.mxu0 %v661
    %v740 = vpop.f32.mrf.mxu0
    %v741 = vadd.f32 0.0, %v740
    %742 = vdwg.mxu0
    %743 = vmatpush.msra.mxu0 %v632
    %744 = vmatpush.msra.mxu0 %v630
    %745 = vmatpush.msra.mxu0 %v628
    %746 = vmatpush.msra.mxu0 %v626
    %747 = vmatpush.msra.mxu0 %v624
    %748 = vmatpush.msra.mxu0 %v622
    %749 = vmatpush.msra.mxu0 %v620
    %750 = vmatpush.msra.mxu0 %v618
    %751 = vmatpush.msra.mxu0 %v616
    %752 = vmatpush.msra.mxu0 %v614
    %753 = vmatpush.msra.mxu0 %v612
    %754 = vmatpush.msra.mxu0 %v610
    %755 = vmatpush.msra.mxu0 %v608
    %756 = vmatpush.msra.mxu0 %v606
    %757 = vmatpush.msra.mxu0 %v604
    %758 = vmatpush.msra.mxu0 %v602
    %759 = vmatmul.f32.gmra.mxu0 %v681
    %v760 = vpop.f32.mrf.mxu0
    %v761 = vadd.f32 %v741, %v760
    %762 = vdwg.mxu0
    %v763 = vmul.f32 %v721, 0.00048828125
    %v764 = vmul.f32 %v761, 0.00048828125
    %v765 = vmul.f32 %v763, %v763
    %v766 = vmul.f32 %v764, %v764
    %v769 = vrot.slane %v765, 7
    %v770 = vrot.slane %v766, 7
    %v773 = vsub.f32 %v763, %v769
    %v774 = vsub.f32 %v764, %v770
    %v775 = vadd.f32 %v773, 1e-05
    %v776 = vadd.f32 %v774, 1e-05
    %v777 = vrsqrt.pop %v775
    %v778 = vmul.f32 %v777, %v775
    %v779 = vmul.f32 %v778, %v777
    %v780 = vmul.f32 0.5, %v779
    %v781 = vsub.f32 1.5, %v780
    %v782 = vmul.f32 %v777, %v781
    %vm783 = vweird.f32 %v775
    %vm784 = vweird.f32 %v777
    %vm785 = vmor %vm783, %vm784
    %v786 = vsel %vm785, %v777, %v782
    %v787 = vrsqrt.pop %v776
    %v788 = vmul.f32 %v787, %v776
    %v789 = vmul.f32 %v788, %v787
    %v790 = vmul.f32 0.5, %v789
    %v791 = vsub.f32 1.5, %v790
    %v792 = vmul.f32 %v787, %v791
    %vm793 = vweird.f32 %v776
    %vm794 = vweird.f32 %v787
    %vm795 = vmor %vm793, %vm794
    %v796 = vsel %vm795, %v787, %v792
    %v797 = vperm.slane %v763, 0
    %v798 = vperm.slane %v764, 0
    %v799 = vsub.f32 %v529, %v797
    %v800 = vsub.f32 %v558, %v798
    %v801 = vsub.f32 %v532, %v797
    %v802 = vsub.f32 %v561, %v798
    %v803 = vsub.f32 %v535, %v797
    %v804 = vsub.f32 %v564, %v798
    %v805 = vsub.f32 %v538, %v797
    %v806 = vsub.f32 %v567, %v798
    %v808 = vperm.slane %v633, 0
    %v809 = vperm.slane %v633, 1
    %v812 = vmul.f32 %v786, %v808
    %v813 = vmul.f32 %v796, %v809
    %v814 = vperm.slane %v812, 1
    %v815 = vperm.slane %v813, 1
    %v816 = vmul.f32 %v799, %v814
    %v817 = vmul.f32 %v800, %v815
    %v818 = vmul.f32 %v801, %v814
    %v819 = vmul.f32 %v802, %v815
    %v820 = vmul.f32 %v803, %v814
    %v821 = vmul.f32 %v804, %v815
    %v822 = vmul.f32 %v805, %v814
    %v823 = vmul.f32 %v806, %v815
    %v825 = vperm.slane %v634, 0
    %v826 = vperm.slane %v634, 1
    %v829 = vadd.f32 %v816, %v825
    %v830 = vadd.f32 %v817, %v826
    %v831 = vadd.f32 %v818, %v825
    %v832 = vadd.f32 %v819, %v826
    %v833 = vadd.f32 %v820, %v825
    %v834 = vadd.f32 %v821, %v826
    %v835 = vadd.f32 %v822, %v825
    %v836 = vadd.f32 %v823, %v826
    %v837 = vmax.f32 %v829, 0.0
    %v838 = vmax.f32 %v830, 0.0
    %v839 = vmax.f32 %v831, 0.0
    %v840 = vmax.f32 %v832, 0.0
    %v841 = vmax.f32 %v833, 0.0
    %v842 = vmax.f32 %v834, 0.0
    %v843 = vmax.f32 %v835, 0.0
    %v844 = vmax.f32 %v836, 0.0
    %845 = vst [vmem:[%s12] sm:$0xff] %v837
    %846 = vst [vmem:[%s12 + $0x8] sm:$0xff] %v838
    %847 = vst [vmem:[%s12 + $0x10] sm:$0xff] %v839
    %848 = vst [vmem:[%s12 + $0x18] sm:$0xff] %v840
    %849 = vst [vmem:[%s12 + $0x20] sm:$0xff] %v841
    %850 = vst [vmem:[%s12 + $0x28] sm:$0xff] %v842
    %851 = vst [vmem:[%s12 + $0x30] sm:$0xff] %v843
    %852 = vst [vmem:[%s12 + $0x38] sm:$0xff] %v844
    // Predicated region
    $region78: #{upblock_forward.1} parent=1 // pred_check
      _
    $region79: #{upblock_forward.1} parent=1 // pred_check_branch
      %854 = sbr.rel (0) target = $region81
    $region80: #{upblock_forward.1} parent=1 // pred_region
      _
    $region81: #{upblock_forward.1} parent=1 // pred_fallthru
      _
    // Predicated region
    $region82: #{upblock_forward.1} parent=1 // pred_check
      _
    $region83: #{upblock_forward.1} parent=1 // pred_check_branch
      %856 = sbr.rel (0) target = $region85
    $region84: #{upblock_forward.1} parent=1 // pred_region
      _
    $region85: #{upblock_forward.1} parent=1 // pred_fallthru
      _
    %857 = vsyncpa [#allocation3], 1
    %858 = vsyncpa [#allocation5], 1
    %859 = vsyncpa [#allocation8], 1
    %860 = vsyncpa [#allocation11], 1

</llo_original>
